<compile_context>
chip_gen: v7x
topology: tpu7x:2x2x1
jax: 0.10.0
libtpu: 0.0.40
codegen_flags: <defaults>
</compile_context>

<pallas_src>
import functools
import math

import jax
import jax.numpy as jnp
from jax import lax
from jax.experimental import pallas as pl
from jax.experimental.pallas import tpu as pltpu


# ----------------------------- helpers ---------------------------------------


def _vmem_limit_bytes():
    # ~100 MiB on 128-MiB-VMEM chips (v5e/v6e), ~51 MiB on v7x (64 MiB VMEM).
    try:
        cap = pltpu.get_tpu_info().vmem_capacity_bytes
    except Exception:
        cap = 64 << 20  # conservative fallback
    return int(min(100 << 20, cap * 0.8))


_VMEM_LIMIT = _vmem_limit_bytes()


def _pick_tile(n, target, align):
    """Largest divisor of n that is <= target and a multiple of `align`;
    falls back to the full dimension (block == full array dim is always legal)."""
    if n <= target:
        return n
    for t in range(target, 0, -1):
        if n % t == 0 and t % align == 0:
            return t
    return n


def _heads_per_group(num_heads, head_dim):
    """Smallest head group whose lane width (hp*hd) is a multiple of 128 so
    ctx / q / k / v blocks get unmasked lane-dense stores; fall back to all
    heads, in which case the block covers the full feature dim (always legal)."""
    for hp in range(1, num_heads + 1):
        if num_heads % hp == 0 and (hp * head_dim) % 128 == 0:
            return hp
    return num_heads


def _zero_index_map(array_rank, grid_rank):
    zeros = (0,) * array_rank
    return {
        1: lambda a: zeros,
        2: lambda a, b: zeros,
        3: lambda a, b, c: zeros,
    }[grid_rank]


@functools.lru_cache(maxsize=1)
def _single_buffer_ok():
    """Probe whether pipeline_mode=pl.Buffered(1) works in this JAX build.
    Single-buffering constant-index (resident) weight blocks halves their VMEM
    footprint (double-buffering a block that never changes is pure waste)."""
    try:
        def probe_kernel(x_ref, o_ref):
            o_ref[...] = x_ref[...] + 1.0

        spec = pl.BlockSpec((8, 128), lambda i: (0, 0),
                            pipeline_mode=pl.Buffered(1))
        out = pl.pallas_call(
            probe_kernel,
            out_shape=jax.ShapeDtypeStruct((8, 128), jnp.float32),
            grid=(1,),
            in_specs=[spec],
            out_specs=pl.BlockSpec((8, 128), lambda i: (0, 0)),
        )(jnp.zeros((8, 128), jnp.float32))
        jax.block_until_ready(out)
        return True
    except Exception:
        return False


def _resident_spec(shape, grid_rank):
    """Whole-array BlockSpec for a weight whose block index never changes;
    single-buffered when the build supports it."""
    idx = _zero_index_map(len(shape), grid_rank)
    if _single_buffer_ok():
        return pl.BlockSpec(shape, idx, pipeline_mode=pl.Buffered(1))
    return pl.BlockSpec(shape, idx)


def _layer_norm(x, w, b, eps=1e-5):
    # x: (T, D) f32 ; w, b: (1, D) f32   (torch LayerNorm default eps)
    mu = jnp.mean(x, axis=-1, keepdims=True)
    var = jnp.mean((x - mu) ** 2, axis=-1, keepdims=True)
    return (x - mu) * lax.rsqrt(var + eps) * w + b


# ----------------------------- kernels ---------------------------------------


def qkv_kernel(x_ref, lnw_ref, lnb_ref, w_ref, b_ref, q_ref, k_ref, v_ref):
    """q,k,v = split(LN1(x_tile) @ W_qkv + b) -> three bf16 (tq, D) slabs.
    Writing q/k/v as separate (B,T,D) arrays removes the XLA split/transpose
    glue: flash attention reads head groups straight out of these buffers."""
    x = x_ref[0].astype(jnp.float32)                      # (tq, D)
    h = _layer_norm(x, lnw_ref[...], lnb_ref[...])
    qkv = jnp.dot(h.astype(jnp.bfloat16), w_ref[...],
                  preferred_element_type=jnp.float32) + b_ref[...]
    qkv = qkv.astype(q_ref.dtype)                         # (tq, 3D) bf16
    d = q_ref.shape[-1]
    q_ref[0] = qkv[:, :d]
    k_ref[0] = qkv[:, d:2 * d]
    v_ref[0] = qkv[:, 2 * d:3 * d]


def flash_attn_kernel(q_ref, k_ref, v_ref, o_ref, *, scale, hp, hd):
    """Causal flash attention for one (batch, head-group, q-tile).

    q_ref : (1, tq, hp*hd)   bf16   (head group lane slice of the q buffer)
    k_ref : (1, T,  hp*hd)   bf16   (whole-sequence K for the head group)
    v_ref : (1, T,  hp*hd)   bf16
    o_ref : (1, tq, hp*hd)   bf16   (written straight into merged (B,T,D) ctx)

    The KV loop runs in-kernel, bounded by the causal length, so tiles above
    the diagonal cost neither DMA nor compute; only the diagonal block builds
    the iota mask.  Softmax scale is folded into q.  Online-softmax statistics
    kept in f32 (v5e has no bf16 VPU path)."""
    i = pl.program_id(2)
    tq = q_ref.shape[1]
    tk = tq
    q_start = i * tq
    neg = jnp.float32(-1e30)

    q = (q_ref[0].astype(jnp.float32) * scale).astype(q_ref.dtype)   # (tq, hp*hd)

    def attend(j, carry, masked):
        ms, ls, accs = carry
        k_start = pl.multiple_of(j * tk, tk)
        k = k_ref[0, pl.ds(k_start, tk), :]               # (tk, hp*hd) bf16
        v = v_ref[0, pl.ds(k_start, tk), :]               # (tk, hp*hd) bf16
        if masked:                                        # diagonal block only
            rows = lax.broadcasted_iota(jnp.int32, (tq, tk), 0) + q_start
            cols = lax.broadcasted_iota(jnp.int32, (tq, tk), 1) + k_start
            keep = cols <= rows
        new_ms, new_ls, new_accs = [], [], []
        for e in range(hp):                               # static unroll over heads
            sl = slice(e * hd, (e + 1) * hd)
            s = lax.dot_general(q[:, sl], k[:, sl],
                                dimension_numbers=(((1,), (1,)), ((), ())),
                                preferred_element_type=jnp.float32)   # (tq, tk)
            if masked:
                s = jnp.where(keep, s, neg)
            m_new = jnp.maximum(ms[e], jnp.max(s, axis=-1, keepdims=True))
            alpha = jnp.exp(ms[e] - m_new)
            p = jnp.exp(s - m_new)
            new_ls.append(alpha * ls[e] + jnp.sum(p, axis=-1, keepdims=True))
            new_accs.append(alpha * accs[e]
                            + jnp.dot(p.astype(v.dtype), v[:, sl],
                                      preferred_element_type=jnp.float32))
            new_ms.append(m_new)
        return tuple(new_ms), tuple(new_ls), tuple(new_accs)

    init = (tuple(jnp.full((tq, 1), neg, jnp.float32) for _ in range(hp)),
            tuple(jnp.zeros((tq, 1), jnp.float32) for _ in range(hp)),
            tuple(jnp.zeros((tq, hd), jnp.float32) for _ in range(hp)))

    n_full = q_start // tk                 # KV blocks strictly below the diagonal
    carry = lax.fori_loop(0, n_full,
                          lambda j, c: attend(j, c, masked=False), init)
    ms, ls, accs = attend(n_full, carry, masked=True)     # diagonal block

    outs = [accs[e] * pl.reciprocal(ls[e], approx=True) for e in range(hp)]
    o_ref[0] = jnp.concatenate(outs, axis=-1).astype(o_ref.dtype)


def proj_mlp_kernel(x_ref, ctx_ref, wo_ref, bo_ref, ln2w_ref, ln2b_ref,
                    wfc_ref, bfc_ref, wpr_ref, bpr_ref, o_ref):
    """x = x + ctx @ W_o + b_o ;  x = x + W_pr gelu(W_fc LN2(x) + b_fc) + b_pr."""
    x = x_ref[0].astype(jnp.float32)                      # (tq, D)
    x = x + jnp.dot(ctx_ref[0], wo_ref[...],
                    preferred_element_type=jnp.float32) + bo_ref[...]
    h = _layer_norm(x, ln2w_ref[...], ln2b_ref[...])
    h = jnp.dot(h.astype(jnp.bfloat16), wfc_ref[...],
                preferred_element_type=jnp.float32) + bfc_ref[...]
    # TODO(synk): reference TransformerBlock is not given; nanoGPT uses the
    # tanh-approximate GELU (also cheaper on the EUP).  Switch to
    # approximate=False if the original block used exact-erf nn.GELU().
    h = jax.nn.gelu(h, approximate=True)
    h = jnp.dot(h.astype(jnp.bfloat16), wpr_ref[...],
                preferred_element_type=jnp.float32) + bpr_ref[...]
    o_ref[0] = (x + h).astype(o_ref.dtype)


def lm_head_kernel(x_ref, w_ref, b_ref, o_ref):
    """Vocabulary projection for one (vocab-tile, token-tile)."""
    logits = jnp.dot(x_ref[...], w_ref[...],
                     preferred_element_type=jnp.float32) + b_ref[...]
    o_ref[...] = logits.astype(o_ref.dtype)


# ----------------------------- wrappers ---------------------------------------


def run_qkv(x, blk, *, tq):
    B, T, D = x.shape
    tile = pl.BlockSpec((1, tq, D), lambda b, i: (b, i, 0))
    out_sd = jax.ShapeDtypeStruct((B, T, D), jnp.bfloat16)
    return pl.pallas_call(
        qkv_kernel,
        out_shape=(out_sd, out_sd, out_sd),
        grid_spec=pltpu.PrefetchScalarGridSpec(
            num_scalar_prefetch=0,
            grid=(B, T // tq),
            in_specs=[
                tile,
                _resident_spec(blk["ln1_w"].shape, 2),
                _resident_spec(blk["ln1_b"].shape, 2),
                _resident_spec(blk["w_qkv"].shape, 2),
                _resident_spec(blk["b_qkv"].shape, 2),
            ],
            out_specs=(tile, tile, tile),
        ),
        compiler_params=pltpu.CompilerParams(
            dimension_semantics=("parallel", "parallel"),
            vmem_limit_bytes=_VMEM_LIMIT),
    )(x, blk["ln1_w"], blk["ln1_b"], blk["w_qkv"], blk["b_qkv"])


def run_flash_attention(q, k, v, *, num_heads, head_dim, heads_per_group, tq):
    B, T, D = q.shape
    hp = heads_per_group
    W = hp * head_dim
    G = num_heads // hp
    kernel = functools.partial(flash_attn_kernel,
                               scale=1.0 / math.sqrt(head_dim),
                               hp=hp, hd=head_dim)
    # TODO(synk): whole-sequence K/V residency (2 * T * hp*hd bf16, double-buffered)
    # assumes moderate block_size; for very long sequences re-tile KV as a grid
    # axis with a causally-clamped index_map instead.
    return pl.pallas_call(
        kernel,
        out_shape=jax.ShapeDtypeStruct((B, T, D), jnp.bfloat16),
        grid_spec=pltpu.PrefetchScalarGridSpec(
            num_scalar_prefetch=0,
            # q-tile axis innermost: the K/V block index is i-invariant, so K/V
            # are DMA'd once per (batch, head-group) and reused across q tiles.
            grid=(B, G, T // tq),
            in_specs=[
                pl.BlockSpec((1, tq, W), lambda b, g, i: (b, i, g)),
                pl.BlockSpec((1, T, W), lambda b, g, i: (b, 0, g)),
                pl.BlockSpec((1, T, W), lambda b, g, i: (b, 0, g)),
            ],
            out_specs=pl.BlockSpec((1, tq, W), lambda b, g, i: (b, i, g)),
        ),
        compiler_params=pltpu.CompilerParams(
            dimension_semantics=("parallel", "parallel", "parallel"),
            vmem_limit_bytes=_VMEM_LIMIT),
    )(q, k, v)


def run_proj_mlp(x, ctx, blk, *, tq):
    B, T, D = x.shape
    tile = pl.BlockSpec((1, tq, D), lambda b, i: (b, i, 0))
    weights = [blk["w_o"], blk["b_o"], blk["ln2_w"], blk["ln2_b"],
               blk["w_fc"], blk["b_fc"], blk["w_pr"], blk["b_pr"]]
    # TODO(synk): for emb_dim >= ~1280 add a hidden-dim (4D) grid axis with an
    # f32 accumulator instead of keeping both MLP weights fully resident (v7x VMEM).
    in_specs = [tile, pl.BlockSpec((1, tq, D), lambda b, i: (b, i, 0))] + \
               [_resident_spec(w.shape, 2) for w in weights]
    return pl.pallas_call(
        proj_mlp_kernel,
        out_shape=jax.ShapeDtypeStruct((B, T, D), jnp.bfloat16),
        grid_spec=pltpu.PrefetchScalarGridSpec(
            num_scalar_prefetch=0,
            grid=(B, T // tq),
            in_specs=in_specs,
            out_specs=pl.BlockSpec((1, tq, D), lambda b, i: (b, i, 0)),
        ),
        compiler_params=pltpu.CompilerParams(
            dimension_semantics=("parallel", "parallel"),
            vmem_limit_bytes=_VMEM_LIMIT),
    )(x, ctx, *weights)


def run_lm_head(x2d, w, b, *, tn, tv, out_dtype):
    N, D = x2d.shape
    V = w.shape[1]
    return pl.pallas_call(
        lm_head_kernel,
        out_shape=jax.ShapeDtypeStruct((N, V), out_dtype),
        grid_spec=pltpu.PrefetchScalarGridSpec(
            num_scalar_prefetch=0,
            # Vocab axis OUTER, token axis INNER: the (D, tv) weight block index
            # is invariant across the inner axis, so each weight tile is DMA'd
            # once while token tiles stream (no per-token-tile weight re-read).
            grid=(V // tv, N // tn),
            in_specs=[
                pl.BlockSpec((tn, D), lambda vv, n: (n, 0)),
                pl.BlockSpec((D, tv), lambda vv, n: (0, vv)),
                pl.BlockSpec((1, tv), lambda vv, n: (0, vv)),
            ],
            out_specs=pl.BlockSpec((tn, tv), lambda vv, n: (n, vv)),
        ),
        compiler_params=pltpu.CompilerParams(
            dimension_semantics=("parallel", "parallel"),
            vmem_limit_bytes=_VMEM_LIMIT),
    )(x2d, w, b)


# ----------------------------- forward ----------------------------------------


def nano_gpt_forward(tokens, params, num_heads, *, tq_target=256, tn_target=512,
                     tv_target=1024, logits_dtype=jnp.bfloat16):
    """tokens: (B, T) int32 -> logits (B, T, vocab).

    logits_dtype defaults to bf16 (halves the dominant (B,T,V) HBM store);
    pass jnp.float32 for closer fidelity to the f32 PyTorch reference."""
    B, T = tokens.shape
    D = params["tok_emb"].shape[1]
    hd = D // num_heads
    tq = _pick_tile(T, tq_target, align=16)     # 16-row bf16 packing tile (v5e)
    hp = _heads_per_group(num_heads, hd)

    # Embedding gathers are table-lookup glue; done in plain JAX.
    x = (params["tok_emb"][tokens] + params["pos_emb"][:T][None, :, :])
    x = x.astype(jnp.bfloat16)                  # bf16 residual stream

    for blk in params["blocks"]:
        q, k, v = run_qkv(x, blk, tq=tq)
        ctx = run_flash_attention(q, k, v, num_heads=num_heads, head_dim=hd,
                                  heads_per_group=hp, tq=tq)
        x = run_proj_mlp(x, ctx, blk, tq=tq)

    # NOTE: the reference NanoGPT feeds the raw residual into lm_pred (no final
    # LayerNorm), so none is applied here.
    V = params["lm_w"].shape[1]
    N = B * T
    tn = _pick_tile(N, tn_target, align=16)
    # TODO(synk): for real vocab sizes (e.g. 50257) pad V to a multiple of 128
    # and mask padded logits downstream; demo V=64 uses the full dim.
    tv = _pick_tile(V, tv_target, align=128)
    logits = run_lm_head(x.reshape(N, D), params["lm_w"], params["lm_b"],
                         tn=tn, tv=tv, out_dtype=logits_dtype)
    return logits.reshape(B, T, V)


# ----------------------------- parameter init ----------------------------------


def init_params(key, vocab_size, block_size, emb_dim, num_blocks):
    D = emb_dim

    def nrm(k, shape, scale=0.02, dtype=jnp.bfloat16):
        return (scale * jax.random.normal(k, shape, jnp.float32)).astype(dtype)

    keys = jax.random.split(key, 3 + num_blocks)
    params = {
        "tok_emb": nrm(keys[0], (vocab_size, D), dtype=jnp.float32),
        "pos_emb": nrm(keys[1], (block_size, D), dtype=jnp.float32),
        "lm_w": nrm(keys[2], (D, vocab_size)),                  # bf16 matmul operand
        "lm_b": jnp.zeros((1, vocab_size), jnp.float32),
        "blocks": [],
    }
    for i in range(num_blocks):
        bk = jax.random.split(keys[3 + i], 4)
        params["blocks"].append({
            "ln1_w": jnp.ones((1, D), jnp.float32),
            "ln1_b": jnp.zeros((1, D), jnp.float32),
            "w_qkv": nrm(bk[0], (D, 3 * D)),                    # bf16
            "b_qkv": jnp.zeros((1, 3 * D), jnp.float32),
            "w_o": nrm(bk[1], (D, D)),                          # bf16
            "b_o": jnp.zeros((1, D), jnp.float32),
            "ln2_w": jnp.ones((1, D), jnp.float32),
            "ln2_b": jnp.zeros((1, D), jnp.float32),
            "w_fc": nrm(bk[2], (D, 4 * D)),                     # bf16
            "b_fc": jnp.zeros((1, 4 * D), jnp.float32),
            "w_pr": nrm(bk[3], (4 * D, D)),                     # bf16
            "b_pr": jnp.zeros((1, D), jnp.float32),
        })
    return params


# ----------------------------- main ---------------------------------------------


if __name__ == "__main__":
    configs = dict(vocab_size=64, block_size=16, emb_dim=32, num_blocks=2, num_heads=4)
    B, T = 2, 8

    key = jax.random.PRNGKey(0)
    pkey, tkey = jax.random.split(key)
    params = init_params(
        pkey, configs["vocab_size"], configs["block_size"],
        configs["emb_dim"], configs["num_blocks"],
    )
    tokens = jax.random.randint(tkey, (B, T), 0, configs["vocab_size"], dtype=jnp.int32)

    logits = nano_gpt_forward(tokens, params, configs["num_heads"])
    jax.block_until_ready(logits)
    assert logits.shape == (B, T, configs["vocab_size"]), logits.shape
    print("KERNEL_OK")
</pallas_src>

<mosaic_0001>
module attributes {stable_mosaic.version = 11 : i64} {
  func.func @probe_kernel(%arg0: i32, %arg1: memref<8x128xf32, #tpu.memory_space<vmem>>, %arg2: memref<8x128xf32, #tpu.memory_space<vmem>>) attributes {dimension_semantics = [#tpu.dimension_semantics<arbitrary>], iteration_bounds = array<i64: 1>, scalar_prefetch = 0 : i64, scratch_operands = 0 : i64, tpu.core_type = #tpu.core_type<tc>, window_params = [{pipeline_mode = #tpu.pipeline_mode<synchronous>, transform_indices = @transform_0, window_bounds = array<i64: 8, 128>}, {pipeline_mode = #tpu.pipeline_mode<synchronous>, transform_indices = @transform_1, window_bounds = array<i64: 8, 128>}]} {
    %c0 = arith.constant 0 : index
    %c0_0 = arith.constant 0 : index
    %0 = vector.load %arg1[%c0, %c0_0] : memref<8x128xf32, #tpu.memory_space<vmem>>, vector<8x128xf32>
    %cst = arith.constant 1.000000e+00 : f32
    %1 = vector.broadcast %cst : f32 to vector<8x128xf32>
    %2 = arith.addf %0, %1 : vector<8x128xf32>
    %c0_1 = arith.constant 0 : index
    %c0_2 = arith.constant 0 : index
    %3 = vector.load %arg2[%c0_1, %c0_2] : memref<8x128xf32, #tpu.memory_space<vmem>>, vector<8x128xf32>
    tpu.vector_store %arg2[%c0_1, %c0_2], %2 {strides = array<i32>} : memref<8x128xf32, #tpu.memory_space<vmem>>, vector<8x128xf32>,
    return
  }
  func.func @transform_0(%arg0: i32) -> (i32, i32) {
    %c0_i32 = arith.constant 0 : i32
    %c0_i32_0 = arith.constant 0 : i32
    %c0_i32_1 = arith.constant 0 : i32
    return %c0_i32, %c0_i32_0 : i32, i32
  }
  func.func @transform_1(%arg0: i32) -> (i32, i32) {
    %c0_i32 = arith.constant 0 : i32
    %c0_i32_0 = arith.constant 0 : i32
    %c0_i32_1 = arith.constant 0 : i32
    return %c0_i32, %c0_i32_0 : i32, i32
  }
}

module attributes {stable_mosaic.version = 11 : i64} {
  func.func @qkv_kernel(%arg0: i32, %arg1: i32, %arg2: memref<1x8x32xbf16, #tpu.memory_space<vmem>>, %arg3: memref<1x32xf32, #tpu.memory_space<vmem>>, %arg4: memref<1x32xf32, #tpu.memory_space<vmem>>, %arg5: memref<32x96xbf16, #tpu.memory_space<vmem>>, %arg6: memref<1x96xf32, #tpu.memory_space<vmem>>, %arg7: memref<1x8x32xbf16, #tpu.memory_space<vmem>>, %arg8: memref<1x8x32xbf16, #tpu.memory_space<vmem>>, %arg9: memref<1x8x32xbf16, #tpu.memory_space<vmem>>) attributes {dimension_semantics = [#tpu.dimension_semantics<parallel>, #tpu.dimension_semantics<parallel>], iteration_bounds = array<i64: 2, 1>, scalar_prefetch = 0 : i64, scratch_operands = 0 : i64, tpu.core_type = #tpu.core_type<tc>, window_params = [{transform_indices = @transform_0, window_bounds = array<i64: 1, 8, 32>}, {pipeline_mode = #tpu.pipeline_mode<synchronous>, transform_indices = @transform_1, window_bounds = array<i64: 1, 32>}, {pipeline_mode = #tpu.pipeline_mode<synchronous>, transform_indices = @transform_2, window_bounds = array<i64: 1, 32>}, {pipeline_mode = #tpu.pipeline_mode<synchronous>, transform_indices = @transform_3, window_bounds = array<i64: 32, 96>}, {pipeline_mode = #tpu.pipeline_mode<synchronous>, transform_indices = @transform_4, window_bounds = array<i64: 1, 96>}, {transform_indices = @transform_5, window_bounds = array<i64: 1, 8, 32>}, {transform_indices = @transform_6, window_bounds = array<i64: 1, 8, 32>}, {transform_indices = @transform_7, window_bounds = array<i64: 1, 8, 32>}]} {
    %c0 = arith.constant 0 : index
    %c0_0 = arith.constant 0 : index
    %c0_1 = arith.constant 0 : index
    %0 = vector.load %arg2[%c0, %c0_0, %c0_1] : memref<1x8x32xbf16, #tpu.memory_space<vmem>>, vector<1x8x32xbf16>
    %1 = vector.shape_cast %0 : vector<1x8x32xbf16> to vector<8x32xbf16>
    %2 = arith.extf %1 : vector<8x32xbf16> to vector<8x32xf32>
    %c0_2 = arith.constant 0 : index
    %c0_3 = arith.constant 0 : index
    %3 = vector.load %arg3[%c0_2, %c0_3] : memref<1x32xf32, #tpu.memory_space<vmem>>, vector<1x32xf32>
    %c0_4 = arith.constant 0 : index
    %c0_5 = arith.constant 0 : index
    %4 = vector.load %arg4[%c0_4, %c0_5] : memref<1x32xf32, #tpu.memory_space<vmem>>, vector<1x32xf32>
    %cst = arith.constant dense<0.000000e+00> : vector<8xf32>
    %5 = vector.multi_reduction <add>, %2, %cst [1] : vector<8x32xf32> to vector<8xf32>
    %6 = vector.shape_cast %5 : vector<8xf32> to vector<8x1xf32>
    %cst_6 = arith.constant 3.200000e+01 : f32
    %7 = vector.broadcast %cst_6 : f32 to vector<8x1xf32>
    %8 = arith.divf %6, %7 : vector<8x1xf32>
    %9 = vector.broadcast %8 : vector<8x1xf32> to vector<8x32xf32>
    %10 = arith.subf %2, %9 : vector<8x32xf32>
    %11 = arith.mulf %10, %10 : vector<8x32xf32>
    %cst_7 = arith.constant dense<0.000000e+00> : vector<8xf32>
    %12 = vector.multi_reduction <add>, %11, %cst_7 [1] : vector<8x32xf32> to vector<8xf32>
    %13 = vector.shape_cast %12 : vector<8xf32> to vector<8x1xf32>
    %cst_8 = arith.constant 3.200000e+01 : f32
    %14 = vector.broadcast %cst_8 : f32 to vector<8x1xf32>
    %15 = arith.divf %13, %14 : vector<8x1xf32>
    %16 = vector.broadcast %8 : vector<8x1xf32> to vector<8x32xf32>
    %17 = arith.subf %2, %16 : vector<8x32xf32>
    %cst_9 = arith.constant 9.99999974E-6 : f32
    %18 = vector.broadcast %cst_9 : f32 to vector<8x1xf32>
    %19 = arith.addf %15, %18 : vector<8x1xf32>
    %20 = math.rsqrt %19 : vector<8x1xf32>
    %21 = vector.broadcast %20 : vector<8x1xf32> to vector<8x32xf32>
    %22 = arith.mulf %17, %21 : vector<8x32xf32>
    %23 = vector.broadcast %3 : vector<1x32xf32> to vector<8x32xf32>
    %24 = arith.mulf %22, %23 : vector<8x32xf32>
    %25 = vector.broadcast %4 : vector<1x32xf32> to vector<8x32xf32>
    %26 = arith.addf %24, %25 : vector<8x32xf32>
    %27 = arith.truncf %26 : vector<8x32xf32> to vector<8x32xbf16>
    %c0_10 = arith.constant 0 : index
    %c0_11 = arith.constant 0 : index
    %28 = vector.load %arg5[%c0_10, %c0_11] : memref<32x96xbf16, #tpu.memory_space<vmem>>, vector<32x96xbf16>
    %cst_12 = arith.constant dense<0.000000e+00> : vector<8x96xf32>
    %29 = tpu.matmul %27, %28, %cst_12 {dimension_numbers = #tpu.dot_dimension_numbers<[1], [0], [0], [1], [0, 0, 1, 1], [], []>} : vector<8x32xbf16>, vector<32x96xbf16>, vector<8x96xf32> -> vector<8x96xf32>
    %c0_13 = arith.constant 0 : index
    %c0_14 = arith.constant 0 : index
    %30 = vector.load %arg6[%c0_13, %c0_14] : memref<1x96xf32, #tpu.memory_space<vmem>>, vector<1x96xf32>
    %31 = vector.broadcast %30 : vector<1x96xf32> to vector<8x96xf32>
    %32 = arith.addf %29, %31 : vector<8x96xf32>
    %33 = arith.truncf %32 : vector<8x96xf32> to vector<8x96xbf16>
    %34 = vector.extract_strided_slice %33 {offsets = [0, 0], sizes = [8, 32], strides = [1, 1]} : vector<8x96xbf16> to vector<8x32xbf16>
    %c0_15 = arith.constant 0 : index
    %c0_16 = arith.constant 0 : index
    %c0_17 = arith.constant 0 : index
    %35 = vector.load %arg7[%c0_15, %c0_16, %c0_17] : memref<1x8x32xbf16, #tpu.memory_space<vmem>>, vector<1x8x32xbf16>
    %36 = vector.shape_cast %35 : vector<1x8x32xbf16> to vector<8x32xbf16>
    %37 = vector.shape_cast %34 : vector<8x32xbf16> to vector<1x8x32xbf16>
    tpu.vector_store %arg7[%c0_15, %c0_16, %c0_17], %37 {strides = array<i32>} : memref<1x8x32xbf16, #tpu.memory_space<vmem>>, vector<1x8x32xbf16>,
    %38 = vector.extract_strided_slice %33 {offsets = [0, 32], sizes = [8, 32], strides = [1, 1]} : vector<8x96xbf16> to vector<8x32xbf16>
    %c0_18 = arith.constant 0 : index
    %c0_19 = arith.constant 0 : index
    %c0_20 = arith.constant 0 : index
    %39 = vector.load %arg8[%c0_18, %c0_19, %c0_20] : memref<1x8x32xbf16, #tpu.memory_space<vmem>>, vector<1x8x32xbf16>
    %40 = vector.shape_cast %39 : vector<1x8x32xbf16> to vector<8x32xbf16>
    %41 = vector.shape_cast %38 : vector<8x32xbf16> to vector<1x8x32xbf16>
    tpu.vector_store %arg8[%c0_18, %c0_19, %c0_20], %41 {strides = array<i32>} : memref<1x8x32xbf16, #tpu.memory_space<vmem>>, vector<1x8x32xbf16>,
    %42 = vector.extract_strided_slice %33 {offsets = [0, 64], sizes = [8, 32], strides = [1, 1]} : vector<8x96xbf16> to vector<8x32xbf16>
    %c0_21 = arith.constant 0 : index
    %c0_22 = arith.constant 0 : index
    %c0_23 = arith.constant 0 : index
    %43 = vector.load %arg9[%c0_21, %c0_22, %c0_23] : memref<1x8x32xbf16, #tpu.memory_space<vmem>>, vector<1x8x32xbf16>
    %44 = vector.shape_cast %43 : vector<1x8x32xbf16> to vector<8x32xbf16>
    %45 = vector.shape_cast %42 : vector<8x32xbf16> to vector<1x8x32xbf16>
    tpu.vector_store %arg9[%c0_21, %c0_22, %c0_23], %45 {strides = array<i32>} : memref<1x8x32xbf16, #tpu.memory_space<vmem>>, vector<1x8x32xbf16>,
    return
  }
  func.func @transform_0(%arg0: i32, %arg1: i32) -> (i32, i32, i32) {
    %c0_i32 = arith.constant 0 : i32
    %c0_i32_0 = arith.constant 0 : i32
    return %arg0, %arg1, %c0_i32 : i32, i32, i32
  }
  func.func @transform_1(%arg0: i32, %arg1: i32) -> (i32, i32) {
    %c0_i32 = arith.constant 0 : i32
    %c0_i32_0 = arith.constant 0 : i32
    %c0_i32_1 = arith.constant 0 : i32
    return %c0_i32, %c0_i32_0 : i32, i32
  }
  func.func @transform_2(%arg0: i32, %arg1: i32) -> (i32, i32) {
    %c0_i32 = arith.constant 0 : i32
    %c0_i32_0 = arith.constant 0 : i32
    %c0_i32_1 = arith.constant 0 : i32
    return %c0_i32, %c0_i32_0 : i32, i32
  }
  func.func @transform_3(%arg0: i32, %arg1: i32) -> (i32, i32) {
    %c0_i32 = arith.constant 0 : i32
    %c0_i32_0 = arith.constant 0 : i32
    %c0_i32_1 = arith.constant 0 : i32
    return %c0_i32, %c0_i32_0 : i32, i32
  }
  func.func @transform_4(%arg0: i32, %arg1: i32) -> (i32, i32) {
    %c0_i32 = arith.constant 0 : i32
    %c0_i32_0 = arith.constant 0 : i32
    %c0_i32_1 = arith.constant 0 : i32
    return %c0_i32, %c0_i32_0 : i32, i32
  }
  func.func @transform_5(%arg0: i32, %arg1: i32) -> (i32, i32, i32) {
    %c0_i32 = arith.constant 0 : i32
    %c0_i32_0 = arith.constant 0 : i32
    return %arg0, %arg1, %c0_i32 : i32, i32, i32
  }
  func.func @transform_6(%arg0: i32, %arg1: i32) -> (i32, i32, i32) {
    %c0_i32 = arith.constant 0 : i32
    %c0_i32_0 = arith.constant 0 : i32
    return %arg0, %arg1, %c0_i32 : i32, i32, i32
  }
  func.func @transform_7(%arg0: i32, %arg1: i32) -> (i32, i32, i32) {
    %c0_i32 = arith.constant 0 : i32
    %c0_i32_0 = arith.constant 0 : i32
    return %arg0, %arg1, %c0_i32 : i32, i32, i32
  }
}

</mosaic_0001>

<llo_original>
// kernel: tpu_custom_call.1
$region0: #{tpu_custom_call.1}
  #allocation0 [shape = 'u32[]', space=smem, size = 0x4, offset = 0x4, fixed_abs, tag = 'smem constant byte address 0x4 - core index']
  #allocation1 [shape = 'u32[144,128]{1,0:T(1,128)}', space=vmem, size = 0x12000, scoped, tag = 'internal scratch']
  %s0 = inlined_call_operand.hbm [shape: f32[8,128], index: 0, kind: input, shape index: {}]
  %s1 = inlined_call_operand.hbm [shape: f32[8,128], index: 1, kind: output, shape index: {}]
  %s2 = sld [smem:[#allocation0]]
  $region18: #{tpu_custom_call.1} parent=0
    _
  %s4 = ssub.s32 1, %s2
  %s5 = scalar_select 0, %s4, %s2
  $region1: #{tpu_custom_call.1} parent=0
    #allocation2 [shape = 'u8[4096]{0}', space=vmem, size = 0x1000, scoped, tag = 'input window, operand 0, single buffered']
    #allocation3 [shape = 's32[1]{0}', space=sflag, size = 0x4, scoped, tag = 'scoped memory for tpu_custom_call.1']
    #allocation4 [shape = 's32[1]{0}', space=sflag, size = 0x4, scoped, tag = 'scoped memory for tpu_custom_call.1']
    #allocation5 [shape = 'u8[4096]{0}', space=vmem, size = 0x1000, scoped, tag = 'output window, operand 0, single buffered']
    %6 = vsyncpa [#allocation3], 0
    %7 = vsyncpa [#allocation4], 0
    // Predicated region
    $region2: #{tpu_custom_call.1} parent=1 // pred_check
      _
    $region3: #{tpu_custom_call.1} parent=1 // pred_check_branch
      %9 = sbr.rel (0) target = $region5
    $region4: #{tpu_custom_call.1} parent=1 // pred_region
      %s11 = ssub.s32 128, 128
      %12 = vsyncadd [#allocation3], %s11
      %s14 = sshll.u32 [#allocation2], 4
      %s15 = int_to_ptr.vmem [resolvable:$true] %s14
      %17 = dma.hbm_to_vmem [thread:$0]  %s0, 128, %s15, [#allocation3]
    $region5: #{tpu_custom_call.1} parent=1 // pred_fallthru
      _
    // Predicated region
    $region6: #{tpu_custom_call.1} parent=1 // pred_check
      _
    $region7: #{tpu_custom_call.1} parent=1 // pred_check_branch
      %19 = sbr.rel (0) target = $region9
    $region8: #{tpu_custom_call.1} parent=1 // pred_region
      %20 = dma.done [#allocation3], 128
    $region9: #{tpu_custom_call.1} parent=1 // pred_fallthru
      _
    %v21 = vld [vmem:[#allocation2] sm:$0xff]
    %v22 = vadd.f32 %v21, 1.0
    %23 = vst [vmem:[#allocation5] sm:$0xff] %v22
    // Predicated region
    $region10: #{tpu_custom_call.1} parent=1 // pred_check
      _
    $region11: #{tpu_custom_call.1} parent=1 // pred_check_branch
      %25 = sbr.rel (0) target = $region13
    $region12: #{tpu_custom_call.1} parent=1 // pred_region
      %s27 = ssub.s32 128, 128
      %28 = vsyncadd [#allocation4], %s27
      %s30 = sshll.u32 [#allocation5], 4
      %s31 = int_to_ptr.vmem [resolvable:$true] %s30
      %33 = dma.vmem_to_hbm [thread:$0]  %s31, 128, %s1, [#allocation4]
    $region13: #{tpu_custom_call.1} parent=1 // pred_fallthru
      _
    // Predicated region
    $region14: #{tpu_custom_call.1} parent=1 // pred_check
      _
    $region15: #{tpu_custom_call.1} parent=1 // pred_check_branch
      %35 = sbr.rel (0) target = $region17
    $region16: #{tpu_custom_call.1} parent=1 // pred_region
      %36 = dma.done [#allocation4], 128
    $region17: #{tpu_custom_call.1} parent=1 // pred_fallthru
      _
    %37 = vsyncpa [#allocation3], 1
    %38 = vsyncpa [#allocation4], 1

// kernel: tpu_custom_call.1
$region0: #{tpu_custom_call.1}
  #allocation0 [shape = 'u32[]', space=smem, size = 0x4, offset = 0x4, fixed_abs, tag = 'smem constant byte address 0x4 - core index']
  #allocation1 [shape = 'u32[144,128]{1,0:T(1,128)}', space=vmem, size = 0x12000, scoped, tag = 'internal scratch']
  %s0 = inlined_call_operand.hbm [shape: bf16[2,8,32], index: 0, kind: input, shape index: {}]
  %s1 = inlined_call_operand.vmem [shape: f32[1,32], index: 1, kind: input, shape index: {}]
  %s2 = inlined_call_operand.vmem [shape: f32[1,32], index: 2, kind: input, shape index: {}]
  %s3 = inlined_call_operand.hbm [shape: bf16[32,96], index: 3, kind: input, shape index: {}]
  %s4 = inlined_call_operand.vmem [shape: f32[1,96], index: 4, kind: input, shape index: {}]
  %s5 = inlined_call_operand.hbm [shape: bf16[2,8,32], index: 5, kind: output, shape index: {0}]
  %s6 = inlined_call_operand.hbm [shape: bf16[2,8,32], index: 6, kind: output, shape index: {1}]
  %s7 = inlined_call_operand.hbm [shape: bf16[2,8,32], index: 7, kind: output, shape index: {2}]
  %8 = xla_tuple %s5, %s6, %s7
  %s9 = sld [smem:[#allocation0]]
  $region77: #{tpu_custom_call.1} parent=0
    _
  %s11 = ssub.s32 1, %s9
  %s12 = scalar_select 0, %s11, %s9
  $region1: #{tpu_custom_call.1} parent=0
    #allocation2 [shape = 'u8[4096]{0}', space=vmem, size = 0x1000, scoped, tag = 'input window, operand 0']
    #allocation3 [shape = 's32[2]{0}', space=sflag, size = 0x8, scoped, tag = 'scoped memory for tpu_custom_call.1']
    #allocation4 [shape = 's32[2]{0}', space=sflag, size = 0x8, scoped, tag = 'scoped memory for tpu_custom_call.1']
    #allocation5 [shape = 'u8[8192]{0}', space=vmem, size = 0x2000, scoped, tag = 'input window, operand 3, single buffered']
    #allocation6 [shape = 's32[1]{0}', space=sflag, size = 0x4, scoped, tag = 'scoped memory for tpu_custom_call.1']
    #allocation7 [shape = 'u8[4096]{0}', space=vmem, size = 0x1000, scoped, tag = 'output window, operand 0']
    #allocation8 [shape = 'u8[4096]{0}', space=vmem, size = 0x1000, scoped, tag = 'output window, operand 1']
    #allocation9 [shape = 's32[2]{0}', space=sflag, size = 0x8, scoped, tag = 'scoped memory for tpu_custom_call.1']
    #allocation10 [shape = 'u8[4096]{0}', space=vmem, size = 0x1000, scoped, tag = 'output window, operand 2']
    %13 = vsyncpa [#allocation3], 0
    %s14 = scalar_lea.sflag [#allocation3], 1
    %15 = vsyncpa %s14, 0
    %16 = vsyncpa [#allocation6], 0
    %17 = vsyncpa [#allocation4], 0
    %s18 = scalar_lea.sflag [#allocation4], 1
    %19 = vsyncpa %s18, 0
    %20 = vsyncpa [#allocation9], 0
    %s21 = scalar_lea.sflag [#allocation9], 1
    %22 = vsyncpa %s21, 0
    loop: start=0, step=1, limit=4
    $region2: #{tpu_custom_call.1} parent=1 // loop_pre_header
      _
    $region3: #{tpu_custom_call.1} parent=1 // loop_header
      %s24 = sphi 0, %s28
      %p25 = scmp.ge.s32.totalorder %s24, 4
      %s31 = sphi 0, %s43
      %s32 = sphi 0, %s39
      %s33 = sphi 0, %s31
      %s34 = sphi 0, %s32
      %s35 = sphi 0, %s33
      %s36 = sphi 0, %s34
      %s48 = sphi 0, %s50
      %s51 = sphi 0, %s48
      %s52 = sphi 0, %s51
      %s68 = sphi 0, %s52
      %s72 = sphi 0, %s72
      %s74 = sphi 0, %s72
      %s75 = sphi 0, %s74
      %s89 = sphi 0, %s75
      %s93 = sphi 0, %s93
      %s95 = sphi 0, %s93
      %s96 = sphi 0, %s95
      %s110 = sphi 0, %s96
      %s114 = sphi 0, %s114
      %s116 = sphi 0, %s114
      %s117 = sphi 0, %s116
      %s131 = sphi 0, %s117
      %s135 = sphi 0, %s135
      %s137 = sphi 0, %s135
      %s138 = sphi 0, %s137
      %s152 = sphi 0, %s138
      %s160 = sphi 0, %s162
      %s163 = sphi 0, %s160
      %s164 = sphi 0, %s163
      %s180 = sphi 0, %s164
      %s188 = sphi 0, %s190
      %s191 = sphi 0, %s188
      %s192 = sphi 0, %s191
      %s208 = sphi 0, %s192
      %s216 = sphi 0, %s218
      %s219 = sphi 0, %s216
      %s220 = sphi 0, %s219
      %s236 = sphi 0, %s220
    $region4: #{tpu_custom_call.1} parent=1 // loop_header_branch
      %27 = sbr.rel (%p25) target = $region8
    $region5: #{tpu_custom_call.1} parent=1 // loop_body
      %s29 = ssub.s32 %s24, 1
      %s30 = ssub.s32 %s24, 2
      %s37 = sadd.s32 1, %s32
      %p38 = scmp.ge.s32.totalorder %s37, 1
      %s39 = scalar_select %p38, 0, %s37
      %s40 = sadd.s32 1, %s31
      %s41 = scalar_select %p38, %s40, %s31
      %p42 = scmp.ge.s32.totalorder %s41, 2
      %s43 = scalar_select %p42, 0, %s41
      %s44 = ssub.s32 %s31, %s43
      %s45 = ssub.s32 %s32, %s39
      %s46 = sor.u32 %s44, %s45
      %p47 = scmp.eq.s32.totalorder %s46, 0
      %s49 = sadd.s32 %s48, 1
      %s50 = scalar_select %p47, %s48, %s49
      %p53 = pneg %p47
      %p54 = scmp.eq.s32.totalorder %s24, 1
      %p55 = por %p53, %p54
      %p56 = scmp.ne.s32.totalorder %s48, %s51
      %p57 = scmp.eq.s32.totalorder %s24, 0
      %p58 = por %p56, %p57
      %p59 = scmp.ne.s32.totalorder %s48, %s51
      %p60 = scmp.eq.s32.totalorder %s29, 1
      %p61 = por %p59, %p60
      %p62 = scmp.ne.s32.totalorder %s51, %s52
      %p63 = scmp.eq.s32.totalorder %s29, 0
      %p64 = por %p62, %p63
      %p65 = scmp.ne.s32.totalorder %s51, %s52
      %p66 = scmp.eq.s32.totalorder %s30, 1
      %p67 = por %p65, %p66
      %p69 = scmp.ne.s32.totalorder %s52, %s68
      %p70 = scmp.eq.s32.totalorder %s30, 0
      %p71 = por %p69, %p70
      %s73 = sadd.s32 %s72, 1
      %p76 = scmp.eq.s32.totalorder %s24, 1
      %p77 = scmp.ne.s32.totalorder %s72, %s74
      %p78 = scmp.eq.s32.totalorder %s24, 0
      %p79 = por %p77, %p78
      %p80 = scmp.ne.s32.totalorder %s72, %s74
      %p81 = scmp.eq.s32.totalorder %s29, 1
      %p82 = por %p80, %p81
      %p83 = scmp.ne.s32.totalorder %s74, %s75
      %p84 = scmp.eq.s32.totalorder %s29, 0
      %p85 = por %p83, %p84
      %p86 = scmp.ne.s32.totalorder %s74, %s75
      %p87 = scmp.eq.s32.totalorder %s30, 1
      %p88 = por %p86, %p87
      %p90 = scmp.ne.s32.totalorder %s75, %s89
      %p91 = scmp.eq.s32.totalorder %s30, 0
      %p92 = por %p90, %p91
      %s94 = sadd.s32 %s93, 1
      %p97 = scmp.eq.s32.totalorder %s24, 1
      %p98 = scmp.ne.s32.totalorder %s93, %s95
      %p99 = scmp.eq.s32.totalorder %s24, 0
      %p100 = por %p98, %p99
      %p101 = scmp.ne.s32.totalorder %s93, %s95
      %p102 = scmp.eq.s32.totalorder %s29, 1
      %p103 = por %p101, %p102
      %p104 = scmp.ne.s32.totalorder %s95, %s96
      %p105 = scmp.eq.s32.totalorder %s29, 0
      %p106 = por %p104, %p105
      %p107 = scmp.ne.s32.totalorder %s95, %s96
      %p108 = scmp.eq.s32.totalorder %s30, 1
      %p109 = por %p107, %p108
      %p111 = scmp.ne.s32.totalorder %s96, %s110
      %p112 = scmp.eq.s32.totalorder %s30, 0
      %p113 = por %p111, %p112
      %s115 = sadd.s32 %s114, 1
      %p118 = scmp.eq.s32.totalorder %s24, 1
      %p119 = scmp.ne.s32.totalorder %s114, %s116
      %p120 = scmp.eq.s32.totalorder %s24, 0
      %p121 = por %p119, %p120
      %p122 = scmp.ne.s32.totalorder %s114, %s116
      %p123 = scmp.eq.s32.totalorder %s29, 1
      %p124 = por %p122, %p123
      %p125 = scmp.ne.s32.totalorder %s116, %s117
      %p126 = scmp.eq.s32.totalorder %s29, 0
      %p127 = por %p125, %p126
      %p128 = scmp.ne.s32.totalorder %s116, %s117
      %p129 = scmp.eq.s32.totalorder %s30, 1
      %p130 = por %p128, %p129
      %p132 = scmp.ne.s32.totalorder %s117, %s131
      %p133 = scmp.eq.s32.totalorder %s30, 0
      %p134 = por %p132, %p133
      %s136 = sadd.s32 %s135, 1
      %p139 = scmp.eq.s32.totalorder %s24, 1
      %p140 = scmp.ne.s32.totalorder %s135, %s137
      %p141 = scmp.eq.s32.totalorder %s24, 0
      %p142 = por %p140, %p141
      %p143 = scmp.ne.s32.totalorder %s135, %s137
      %p144 = scmp.eq.s32.totalorder %s29, 1
      %p145 = por %p143, %p144
      %p146 = scmp.ne.s32.totalorder %s137, %s138
      %p147 = scmp.eq.s32.totalorder %s29, 0
      %p148 = por %p146, %p147
      %p149 = scmp.ne.s32.totalorder %s137, %s138
      %p150 = scmp.eq.s32.totalorder %s30, 1
      %p151 = por %p149, %p150
      %p153 = scmp.ne.s32.totalorder %s138, %s152
      %p154 = scmp.eq.s32.totalorder %s30, 0
      %p155 = por %p153, %p154
      %s156 = ssub.s32 %s31, %s43
      %s157 = ssub.s32 %s32, %s39
      %s158 = sor.u32 %s156, %s157
      %p159 = scmp.eq.s32.totalorder %s158, 0
      %s161 = sadd.s32 %s160, 1
      %s162 = scalar_select %p159, %s160, %s161
      %p165 = pneg %p159
      %p166 = scmp.eq.s32.totalorder %s24, 1
      %p167 = por %p165, %p166
      %p168 = scmp.ne.s32.totalorder %s160, %s163
      %p169 = scmp.eq.s32.totalorder %s24, 0
      %p170 = por %p168, %p169
      %p171 = scmp.ne.s32.totalorder %s160, %s163
      %p172 = scmp.eq.s32.totalorder %s29, 1
      %p173 = por %p171, %p172
      %p174 = scmp.ne.s32.totalorder %s163, %s164
      %p175 = scmp.eq.s32.totalorder %s29, 0
      %p176 = por %p174, %p175
      %p177 = scmp.ne.s32.totalorder %s163, %s164
      %p178 = scmp.eq.s32.totalorder %s30, 1
      %p179 = por %p177, %p178
      %p181 = scmp.ne.s32.totalorder %s164, %s180
      %p182 = scmp.eq.s32.totalorder %s30, 0
      %p183 = por %p181, %p182
      %s184 = ssub.s32 %s31, %s43
      %s185 = ssub.s32 %s32, %s39
      %s186 = sor.u32 %s184, %s185
      %p187 = scmp.eq.s32.totalorder %s186, 0
      %s189 = sadd.s32 %s188, 1
      %s190 = scalar_select %p187, %s188, %s189
      %p193 = pneg %p187
      %p194 = scmp.eq.s32.totalorder %s24, 1
      %p195 = por %p193, %p194
      %p196 = scmp.ne.s32.totalorder %s188, %s191
      %p197 = scmp.eq.s32.totalorder %s24, 0
      %p198 = por %p196, %p197
      %p199 = scmp.ne.s32.totalorder %s188, %s191
      %p200 = scmp.eq.s32.totalorder %s29, 1
      %p201 = por %p199, %p200
      %p202 = scmp.ne.s32.totalorder %s191, %s192
      %p203 = scmp.eq.s32.totalorder %s29, 0
      %p204 = por %p202, %p203
      %p205 = scmp.ne.s32.totalorder %s191, %s192
      %p206 = scmp.eq.s32.totalorder %s30, 1
      %p207 = por %p205, %p206
      %p209 = scmp.ne.s32.totalorder %s192, %s208
      %p210 = scmp.eq.s32.totalorder %s30, 0
      %p211 = por %p209, %p210
      %s212 = ssub.s32 %s31, %s43
      %s213 = ssub.s32 %s32, %s39
      %s214 = sor.u32 %s212, %s213
      %p215 = scmp.eq.s32.totalorder %s214, 0
      %s217 = sadd.s32 %s216, 1
      %s218 = scalar_select %p215, %s216, %s217
      %p221 = pneg %p215
      %p222 = scmp.eq.s32.totalorder %s24, 1
      %p223 = por %p221, %p222
      %p224 = scmp.ne.s32.totalorder %s216, %s219
      %p225 = scmp.eq.s32.totalorder %s24, 0
      %p226 = por %p224, %p225
      %p227 = scmp.ne.s32.totalorder %s216, %s219
      %p228 = scmp.eq.s32.totalorder %s29, 1
      %p229 = por %p227, %p228
      %p230 = scmp.ne.s32.totalorder %s219, %s220
      %p231 = scmp.eq.s32.totalorder %s29, 0
      %p232 = por %p230, %p231
      %p233 = scmp.ne.s32.totalorder %s219, %s220
      %p234 = scmp.eq.s32.totalorder %s30, 1
      %p235 = por %p233, %p234
      %p237 = scmp.ne.s32.totalorder %s220, %s236
      %p238 = scmp.eq.s32.totalorder %s30, 0
      %p239 = por %p237, %p238
      %p240 = scmp.le.s32.totalorder 1, %s24
      %p241 = scmp.lt.s32.totalorder %s24, 3
      %p242 = pnand %p240, %p241
      %p243 = pneg %p242
      // Predicated region
      $region9: #{tpu_custom_call.1} parent=5 // pred_check
        _
      $region10: #{tpu_custom_call.1} parent=5 // pred_check_branch
        %245 = sbr.rel (%p242) target = $region12
      $region11: #{tpu_custom_call.1} parent=5 // pred_region
        %s246 = ssub.s32 %s24, 1
        // Predicated region
        $region13: #{tpu_custom_call.1} parent=11 // pred_check
          %p247 = pneg %p85
        $region14: #{tpu_custom_call.1} parent=11 // pred_check_branch
          %249 = sbr.rel (%p247) target = $region16
        $region15: #{tpu_custom_call.1} parent=11 // pred_region
          _
        $region16: #{tpu_custom_call.1} parent=11 // pred_fallthru
          _
        // Predicated region
        $region17: #{tpu_custom_call.1} parent=11 // pred_check
          %p250 = pneg %p106
        $region18: #{tpu_custom_call.1} parent=11 // pred_check_branch
          %252 = sbr.rel (%p250) target = $region20
        $region19: #{tpu_custom_call.1} parent=11 // pred_region
          _
        $region20: #{tpu_custom_call.1} parent=11 // pred_fallthru
          _
        // Predicated region
        $region21: #{tpu_custom_call.1} parent=11 // pred_check
          %p253 = pneg %p127
        $region22: #{tpu_custom_call.1} parent=11 // pred_check_branch
          %255 = sbr.rel (%p253) target = $region24
        $region23: #{tpu_custom_call.1} parent=11 // pred_region
          %s257 = ssub.s32 256, 256
          %258 = vsyncadd [#allocation6], %s257
          %s259 = sshll.u32 [#allocation5], 4
          %s260 = int_to_ptr.vmem [resolvable:$true] %s259
          %265 = dma.hbm_to_vmem [thread:$0]  %s3, 256, %s260, [#allocation6], 64, 64, 4
        $region24: #{tpu_custom_call.1} parent=11 // pred_fallthru
          _
        // Predicated region
        $region25: #{tpu_custom_call.1} parent=11 // pred_check
          %p266 = pneg %p148
        $region26: #{tpu_custom_call.1} parent=11 // pred_check_branch
          %268 = sbr.rel (%p266) target = $region28
        $region27: #{tpu_custom_call.1} parent=11 // pred_region
          _
        $region28: #{tpu_custom_call.1} parent=11 // pred_fallthru
          _
      $region12: #{tpu_custom_call.1} parent=5 // pred_fallthru
        _
      %p269 = scmp.lt.s32.totalorder %s24, 2
      // Predicated region
      $region29: #{tpu_custom_call.1} parent=5 // pred_check
        %p270 = pneg %p269
      $region30: #{tpu_custom_call.1} parent=5 // pred_check_branch
        %272 = sbr.rel (%p270) target = $region32
      $region31: #{tpu_custom_call.1} parent=5 // pred_region
        // Predicated region
        $region33: #{tpu_custom_call.1} parent=31 // pred_check
          %p273 = pneg %p58
        $region34: #{tpu_custom_call.1} parent=31 // pred_check_branch
          %275 = sbr.rel (%p273) target = $region36
        $region35: #{tpu_custom_call.1} parent=31 // pred_region
          %s276 = sand.u32 %s48, 1
          %s277 = scalar_lea.sflag [#allocation3], %s276
          %s278 = sand.u32 %s48, 1
          %s279 = smul.addr %s278, 4
          %s280 = scalar_lea.vmem [#allocation2], %s279
          %s282 = ssub.s32 64, 64
          %283 = vsyncadd %s277, %s282
          %s284 = sadd.s32 %s32, %s31
          %s285 = smul.addr %s284, 64
          %s286 = scalar_lea.hbm %s0, %s285
          %s288 = sshll.u32 %s280, 4
          %s289 = int_to_ptr.vmem [resolvable:$true] %s288
          %291 = dma.hbm_to_vmem [thread:$0]  %s286, 64, %s289, %s277
        $region36: #{tpu_custom_call.1} parent=31 // pred_fallthru
          _
      $region32: #{tpu_custom_call.1} parent=5 // pred_fallthru
        _
      %p292 = scmp.le.s32.totalorder 1, %s24
      %p293 = scmp.lt.s32.totalorder %s24, 3
      %p294 = pnand %p292, %p293
      %p295 = pneg %p294
      // Predicated region
      $region37: #{tpu_custom_call.1} parent=5 // pred_check
        _
      $region38: #{tpu_custom_call.1} parent=5 // pred_check_branch
        %297 = sbr.rel (%p294) target = $region40
      $region39: #{tpu_custom_call.1} parent=5 // pred_region
        %s298 = ssub.s32 %s24, 1
        %s299 = sand.u32 %s51, 1
        %s300 = scalar_lea.sflag [#allocation3], %s299
        %s301 = sand.u32 %s51, 1
        %s302 = smul.addr %s301, 4
        %s303 = scalar_lea.vmem [#allocation2], %s302
        // Predicated region
        $region41: #{tpu_custom_call.1} parent=39 // pred_check
          %p304 = pneg %p64
        $region42: #{tpu_custom_call.1} parent=39 // pred_check_branch
          %306 = sbr.rel (%p304) target = $region44
        $region43: #{tpu_custom_call.1} parent=39 // pred_region
          %307 = dma.done %s300, 64
        $region44: #{tpu_custom_call.1} parent=39 // pred_fallthru
          _
        // Predicated region
        $region45: #{tpu_custom_call.1} parent=39 // pred_check
          %p308 = pneg %p127
        $region46: #{tpu_custom_call.1} parent=39 // pred_check_branch
          %310 = sbr.rel (%p308) target = $region48
        $region47: #{tpu_custom_call.1} parent=39 // pred_region
          %311 = dma.done [#allocation6], 256
        $region48: #{tpu_custom_call.1} parent=39 // pred_fallthru
          _
        %s312 = sand.u32 %s51, 1
        %s313 = scalar_lea.sflag [#allocation3], %s312
        %s314 = sand.u32 %s51, 1
        %s315 = smul.addr %s314, 4
        %s316 = scalar_lea.vmem [#allocation2], %s315
        %p317 = pneg %p64
        %p318 = pneg %p61
        %p319 = pneg %p85
        %p320 = pneg %p82
        %p321 = pneg %p106
        %p322 = pneg %p103
        %p323 = pneg %p127
        %p324 = pneg %p124
        %p325 = pneg %p148
        %p326 = pneg %p145
        %p327 = pneg %p176
        %p328 = pneg %p173
        %s329 = sand.u32 %s163, 1
        %s330 = scalar_lea.sflag [#allocation4], %s329
        %s331 = sand.u32 %s163, 1
        %s332 = smul.addr %s331, 4
        %s333 = scalar_lea.vmem [#allocation7], %s332
        %p334 = pneg %p204
        %p335 = pneg %p201
        %s336 = sand.u32 %s29, 1
        %s337 = scalar_lea.sflag [#allocation9], %s336
        %s338 = sand.u32 %s191, 1
        %s339 = smul.addr %s338, 4
        %s340 = scalar_lea.vmem [#allocation8], %s339
        %p341 = pneg %p232
        %p342 = pneg %p229
        %s343 = sand.u32 %s29, 1
        %s344 = scalar_lea.sflag [#allocation9], %s343
        %s345 = sand.u32 %s219, 1
        %s346 = smul.addr %s345, 4
        %s347 = scalar_lea.vmem [#allocation10], %s346
        %v349 = vld [vmem:[%s303] sm:$0xf]
        %v350 = vunpack.c.l.bf16 %v349
        %v351 = vld [vmem:[%s1] sm:$0x1]
        %v352 = vld [vmem:[%s2] sm:$0x1]
        %vm353 = vcmask 261120
        %v354 = vsel %vm353, %v350, 0.0
        %355 = vadd.xlane.f32.xlu0 %v354
        %v356 = vpop.xlane.xlu0 %355
        %v357 = vrcp.pop 32.0
        %v358 = vmul.f32 %v356, %v357
        %v359 = vsub.f32 %v350, %v358
        %v360 = vmul.f32 %v359, %v359
        %v361 = vsel %vm353, %v360, 0.0
        %362 = vadd.xlane.f32.xlu0 %v361
        %v363 = vpop.xlane.xlu0 %362
        %v364 = vmul.f32 %v363, %v357
        %v365 = vadd.f32 %v364, 1e-05
        %v366 = vrsqrt.pop %v365
        %v367 = vmul.f32 %v359, %v366
        %v369 = vlaneseq
        %v370 = vshrl.u32 %v369, 7
        %v371 = vsub.s32 0, %v370
        %v372 = vrot.slane %v351, %v371
        %v374 = vmul.f32 %v367, %v372
        %v376 = vlaneseq
        %v377 = vshrl.u32 %v376, 7
        %v378 = vsub.s32 0, %v377
        %v379 = vrot.slane %v352, %v378
        %v381 = vadd.f32 %v374, %v379
        %v382 = vpack.c.bf16 %v381, %v381
        %v383 = vld [vmem:[#allocation5] sm:$0xf]
        %v384 = vld [vmem:[#allocation5 + $0x4] sm:$0xf]
        %v385 = vld [vmem:[#allocation5 + $0x8] sm:$0xf]
        %v386 = vld [vmem:[#allocation5 + $0xc] sm:$0xf]
        %v387 = vld [vmem:[%s4] sm:$0x1]
        %v389 = vlaneseq
        %v390 = vshrl.u32 %v389, 7
        %v391 = vsub.s32 0, %v390
        %v392 = vrot.slane %v387, %v391
        %v398 = vunpack.c.l.b16 %v383
        %v399 = vunpack.c.l.b16 %v384
        %v400 = vunpack.c.l.b16 %v385
        %v401 = vunpack.c.l.b16 %v386
        %v402 = vpack.c.b16 %v399, %v398
        %v403 = vpack.c.b16 %v401, %v400
        %v407 = vsel %vm353, %v382, 0
        %409 = vmatprep.subr.bf16.mxu0 0
        %410 = vmatpush1.bf16.msra.mxu0 %v402
        %411 = vmatprep.subr.bf16.mxu0 0
        %412 = vmatpush1.bf16.msra.mxu0 %v403
        %413 = vmatprep.subr.bf16.mxu0 0
        %414 = vmatpush1.bf16.msra.mxu0 0
        %415 = vmatprep.subr.bf16.mxu0 0
        %416 = vmatpush1.bf16.msra.mxu0 0
        %417 = vmatprep.subr.bf16.mxu0 0
        %418 = vmatpush1.bf16.msra.mxu0 0
        %419 = vmatprep.subr.bf16.mxu0 0
        %420 = vmatpush1.bf16.msra.mxu0 0
        %421 = vmatprep.subr.bf16.mxu0 0
        %422 = vmatpush1.bf16.msra.mxu0 0
        %423 = vmatprep.subr.bf16.mxu0 0
        %424 = vmatpush1.bf16.msra.mxu0 0
        %425 = vmatprep.subr.bf16.mxu0 0
        %426 = vmatpush1.bf16.msra.mxu0 0
        %427 = vmatprep.subr.bf16.mxu0 0
        %428 = vmatpush1.bf16.msra.mxu0 0
        %429 = vmatprep.subr.bf16.mxu0 0
        %430 = vmatpush1.bf16.msra.mxu0 0
        %431 = vmatprep.subr.bf16.mxu0 0
        %432 = vmatpush1.bf16.msra.mxu0 0
        %433 = vmatprep.subr.bf16.mxu0 0
        %434 = vmatpush1.bf16.msra.mxu0 0
        %435 = vmatprep.subr.bf16.mxu0 0
        %436 = vmatpush1.bf16.msra.mxu0 0
        %437 = vmatprep.subr.bf16.mxu0 0
        %438 = vmatpush1.bf16.msra.mxu0 0
        %439 = vmatprep.subr.bf16.mxu0 0
        %440 = vmatpush1.bf16.msra.mxu0 0
        %441 = vmatprep.mubr.bf16.mxu0 0
        %442 = vmatmul.mubr.bf16.gmra.mrb[0].mxu0 %v407
        %v443 = vpop.f32.mrb[0].mxu0
        %v444 = vadd.f32 %v392, %v443
        %v445 = vpop.f32.mrb[0].mxu0
        %v446 = vpop.f32.mrb[0].mxu0
        %v447 = vpop.f32.mrb[0].mxu0
        %448 = vdwg.mxu0
        %v449 = vpack.c.bf16 %v444, %v444
        %vm450 = vcmask 257024
        %451 = vst.msk [vmem:[%s333] sm:$0xf] %vm450, %v449
        %v453 = vunpack.c.l.b16 %v449
        %v454 = vpack.c.b16 %v453, %v453
        %455 = vrot.lane.b32.xlu0 %v454, 96
        %v456 = vpop.permute.xlu0 %455
        %458 = vst.msk [vmem:[%s340] sm:$0xf] %vm450, %v456
        %459 = vrot.lane.b32.xlu0 %v454, 64
        %v460 = vpop.permute.xlu0 %459
        %462 = vst.msk [vmem:[%s347] sm:$0xf] %vm450, %v460
        %s463 = sand.u32 %s163, 1
        %s464 = scalar_lea.sflag [#allocation4], %s463
        %s465 = sand.u32 %s163, 1
        %s466 = smul.addr %s465, 4
        %s467 = scalar_lea.vmem [#allocation7], %s466
        %s468 = sand.u32 %s29, 1
        %s469 = scalar_lea.sflag [#allocation9], %s468
        %s470 = sand.u32 %s191, 1
        %s471 = smul.addr %s470, 4
        %s472 = scalar_lea.vmem [#allocation8], %s471
        %s473 = sand.u32 %s29, 1
        %s474 = scalar_lea.sflag [#allocation9], %s473
        %s475 = sand.u32 %s219, 1
        %s476 = smul.addr %s475, 4
        %s477 = scalar_lea.vmem [#allocation10], %s476
        // Predicated region
        $region49: #{tpu_custom_call.1} parent=39 // pred_check
          %p478 = pneg %p173
        $region50: #{tpu_custom_call.1} parent=39 // pred_check_branch
          %480 = sbr.rel (%p478) target = $region52
        $region51: #{tpu_custom_call.1} parent=39 // pred_region
          %s482 = ssub.s32 64, 64
          %483 = vsyncadd %s464, %s482
          %s484 = sadd.s32 %s34, %s33
          %s485 = smul.addr %s484, 64
          %s486 = scalar_lea.hbm %s5, %s485
          %s488 = sshll.u32 %s467, 4
          %s489 = int_to_ptr.vmem [resolvable:$true] %s488
          %491 = dma.vmem_to_hbm [thread:$0]  %s489, 64, %s486, %s464
        $region52: #{tpu_custom_call.1} parent=39 // pred_fallthru
          _
        // Predicated region
        $region53: #{tpu_custom_call.1} parent=39 // pred_check
          %p492 = pneg %p201
        $region54: #{tpu_custom_call.1} parent=39 // pred_check_branch
          %494 = sbr.rel (%p492) target = $region56
        $region55: #{tpu_custom_call.1} parent=39 // pred_region
          %s496 = ssub.s32 64, 64
          %497 = vsyncadd %s469, %s496
          %s498 = sadd.s32 %s34, %s33
          %s499 = smul.addr %s498, 64
          %s500 = scalar_lea.hbm %s6, %s499
          %s502 = sshll.u32 %s472, 4
          %s503 = int_to_ptr.vmem [resolvable:$true] %s502
          %505 = dma.vmem_to_hbm [thread:$0]  %s503, 64, %s500, %s469
        $region56: #{tpu_custom_call.1} parent=39 // pred_fallthru
          _
        // Predicated region
        $region57: #{tpu_custom_call.1} parent=39 // pred_check
          %p506 = pneg %p229
        $region58: #{tpu_custom_call.1} parent=39 // pred_check_branch
          %508 = sbr.rel (%p506) target = $region60
        $region59: #{tpu_custom_call.1} parent=39 // pred_region
          %s510 = ssub.s32 64, 64
          %511 = vsyncadd %s474, %s510
          %s512 = sadd.s32 %s34, %s33
          %s513 = smul.addr %s512, 64
          %s514 = scalar_lea.hbm %s7, %s513
          %s516 = sshll.u32 %s477, 4
          %s517 = int_to_ptr.vmem [resolvable:$true] %s516
          %519 = dma.vmem_to_hbm [thread:$0]  %s517, 64, %s514, %s474
        $region60: #{tpu_custom_call.1} parent=39 // pred_fallthru
          _
      $region40: #{tpu_custom_call.1} parent=5 // pred_fallthru
        _
      %p520 = scmp.le.s32.totalorder 2, %s24
      // Predicated region
      $region61: #{tpu_custom_call.1} parent=5 // pred_check
        %p521 = pneg %p520
      $region62: #{tpu_custom_call.1} parent=5 // pred_check_branch
        %523 = sbr.rel (%p521) target = $region64
      $region63: #{tpu_custom_call.1} parent=5 // pred_region
        %s524 = ssub.s32 %s24, 2
        // Predicated region
        $region65: #{tpu_custom_call.1} parent=63 // pred_check
          %p525 = pneg %p179
        $region66: #{tpu_custom_call.1} parent=63 // pred_check_branch
          %527 = sbr.rel (%p525) target = $region68
        $region67: #{tpu_custom_call.1} parent=63 // pred_region
          %s528 = sand.u32 %s164, 1
          %s529 = scalar_lea.sflag [#allocation4], %s528
          %s530 = sand.u32 %s164, 1
          %s531 = smul.addr %s530, 4
          %s532 = scalar_lea.vmem [#allocation7], %s531
          %533 = dma.done %s529, 64
        $region68: #{tpu_custom_call.1} parent=63 // pred_fallthru
          _
        // Predicated region
        $region69: #{tpu_custom_call.1} parent=63 // pred_check
          %p534 = pneg %p207
        $region70: #{tpu_custom_call.1} parent=63 // pred_check_branch
          %536 = sbr.rel (%p534) target = $region72
        $region71: #{tpu_custom_call.1} parent=63 // pred_region
          %s537 = sand.u32 %s30, 1
          %s538 = scalar_lea.sflag [#allocation9], %s537
          %s539 = sand.u32 %s192, 1
          %s540 = smul.addr %s539, 4
          %s541 = scalar_lea.vmem [#allocation8], %s540
          %542 = dma.done %s538, 64
        $region72: #{tpu_custom_call.1} parent=63 // pred_fallthru
          _
        // Predicated region
        $region73: #{tpu_custom_call.1} parent=63 // pred_check
          %p543 = pneg %p235
        $region74: #{tpu_custom_call.1} parent=63 // pred_check_branch
          %545 = sbr.rel (%p543) target = $region76
        $region75: #{tpu_custom_call.1} parent=63 // pred_region
          %s546 = sand.u32 %s30, 1
          %s547 = scalar_lea.sflag [#allocation9], %s546
          %s548 = sand.u32 %s220, 1
          %s549 = smul.addr %s548, 4
          %s550 = scalar_lea.vmem [#allocation10], %s549
          %551 = dma.done %s547, 64
        $region76: #{tpu_custom_call.1} parent=63 // pred_fallthru
          _
      $region64: #{tpu_custom_call.1} parent=5 // pred_fallthru
        _
    $region6: #{tpu_custom_call.1} parent=1 // loop_footer
      %s28 = sadd.s32 1, %s24
    $region7: #{tpu_custom_call.1} parent=1 // loop_footer_branch
      %23 = sbr.rel target = $region3
    $region8: #{tpu_custom_call.1} parent=1 // loop_exit
      _
    %552 = vsyncpa [#allocation3], 1
    %s553 = scalar_lea.sflag [#allocation3], 1
    %554 = vsyncpa %s553, 1
    %555 = vsyncpa [#allocation6], 1
    %556 = vsyncpa [#allocation4], 1
    %s557 = scalar_lea.sflag [#allocation4], 1
    %558 = vsyncpa %s557, 1
    %559 = vsyncpa [#allocation9], 1
    %s560 = scalar_lea.sflag [#allocation9], 1
    %561 = vsyncpa %s560, 1

</llo_original>
